<compile_context>
chip_gen: v5e
topology: v5e:2x2
jax: 0.10.0
libtpu: 0.0.40
codegen_flags: <defaults>
</compile_context>

<pallas_src>
import jax
import jax.numpy as jnp
from jax.experimental import pallas as pl
from jax.experimental.pallas import tpu as pltpu


# ----------------------------- helpers ------------------------------------- #

def _round_up(n, m):
    return ((n + m - 1) // m) * m


# ----------------------------- Pallas kernel -------------------------------- #

def make_fused_mlp_kernel(init_size, num_stacked_layers):
    """Whole-network fused kernel (BN folded into W'/b'):
         h  = relu(sum_k x[:, k] * W0'[k] + b0')          (VPU outer product, K tiny)
         h  = relu(h @ W'[l] + b'[l])  for l in range(L)  (bf16 MXU, f32 accum)
         y  = sum(h * wf, lanes) + bf
         out = (tanh(y) + 1) / 2   stored lane-dense as (1, block_b)
    """
    F = init_size
    L = num_stacked_layers

    def kernel(x_ref, w0_ref, b0_ref, w_ref, b_ref, wf_ref, bf_ref, o_ref):
        # ---- layer 0: tiny-K outer product on the VPU (no MXU, no lane pad) ----
        h = b0_ref[...]                                        # (1, P) f32
        for k in range(F):                                     # static unroll
            h = h + x_ref[:, k:k + 1] * w0_ref[k:k + 1, :]     # (block_b, P)
        h = jnp.maximum(h, 0.0)

        # ---- hidden layers: bf16 MXU operands, f32 accumulation ----
        for l in range(L):                                     # static unroll (small L)
            acc = jnp.dot(h.astype(jnp.bfloat16), w_ref[l],
                          preferred_element_type=jnp.float32)
            h = jnp.maximum(acc + b_ref[l], 0.0)               # bias+BN folded, f32

        # ---- final Linear(H, 1): VPU mul + lane reduce, f32 tanh remap ----
        y = jnp.sum(h * wf_ref[...], axis=-1, keepdims=True) + bf_ref[...]  # (block_b, 1)
        out = (jnp.tanh(y) + 1.0) * 0.5
        # lane-dense store: one XLU transpose -> unmasked vst on 128-wide lanes
        o_ref[...] = jnp.transpose(out)                        # (1, block_b)

    return kernel


# ------------------------------ wrapper ------------------------------------- #

def fused_simple_forward(x, kparams, *, block_b=None):
    """x: (B, F) f32 (unpadded).
       kparams = (w0 (F,P) f32, b0 (1,P) f32, w_stack (L,P,P) bf16,
                  b_stack (L,1,P) f32, wf (1,P) f32, bf (1,1) f32)."""
    w0, b0, w_stack, b_stack, wf, bf = kparams
    B, F = x.shape
    L, P, _ = w_stack.shape

    if block_b is None:
        if B >= 256:
            # >= 2 grid steps so the "parallel" batch axis can shard across the two
            # TensorCores on v7x; lane-aligned (multiple of 128) so the (1, block_b)
            # output block stays lane-dense and the x block sublane-aligned.
            block_b = max(128, min(512, _round_up(B // 2, 128)))
        else:
            block_b = B      # single grid step -> full-extent blocks, no alignment need

    grid_b = pl.cdiv(B, block_b)
    b_pad = grid_b * block_b
    if b_pad != B:
        x = jnp.pad(x, ((0, b_pad - B), (0, 0)))   # pad batch only (rows sliced off below)

    # advisory cost estimate (real work, not padded-lane FLOPs for layer 0)
    flops = int(2 * b_pad * F * P + 2 * b_pad * P * P * L + 3 * b_pad * P)
    bytes_accessed = int(
        b_pad * F * 4 + w0.size * 4 + b0.size * 4
        + w_stack.size * 2 + b_stack.size * 4 + wf.size * 4 + 4 + b_pad * 4)

    # explicit VMEM budget: bf16 weight slab (x2 headroom) + activation tiles + scratch
    weight_bytes = 2 * (w_stack.size * 2 + b_stack.size * 4 + w0.size * 4
                        + b0.size * 4 + wf.size * 4 + 4)
    act_bytes = 2 * (block_b * F * 4 + block_b * 4) + 4 * block_b * P * 4
    vmem_limit = int(min(48 * 1024 * 1024,
                         max(4 * 1024 * 1024, weight_bytes + act_bytes)))

    out = pl.pallas_call(
        make_fused_mlp_kernel(F, L),
        out_shape=jax.ShapeDtypeStruct((1, b_pad), jnp.float32),   # lane-dense output
        grid=(grid_b,),
        in_specs=[
            pl.BlockSpec((block_b, F), lambda i: (i, 0)),   # activations: tiled over batch
            # constant index_maps -> Mosaic hoists these DMAs; weights stay resident
            pl.BlockSpec((F, P), lambda i: (0, 0)),         # layer-0 weight (f32, VPU)
            pl.BlockSpec((1, P), lambda i: (0, 0)),         # layer-0 folded bias
            pl.BlockSpec((L, P, P), lambda i: (0, 0, 0)),   # stacked hidden weights (bf16)
            pl.BlockSpec((L, 1, P), lambda i: (0, 0, 0)),   # stacked folded biases (f32)
            pl.BlockSpec((1, P), lambda i: (0, 0)),         # final weight row
            pl.BlockSpec((1, 1), lambda i: (0, 0)),         # final bias
        ],
        out_specs=pl.BlockSpec((1, block_b), lambda i: (0, i)),
        compiler_params=pltpu.CompilerParams(
            dimension_semantics=("parallel",),              # batch axis: megacore-splittable
            vmem_limit_bytes=vmem_limit),
        cost_estimate=pl.CostEstimate(
            flops=flops, transcendentals=b_pad, bytes_accessed=bytes_accessed),
    )(x, w0, b0, w_stack, b_stack, wf, bf)

    return out[0, :B].reshape(B, 1)


# --------------------------- parameter creation ------------------------------ #

def make_params(key, init_size, hidden_size, num_hidden_layers):
    """Raw parameters mirroring PyTorch defaults:
       Linear: U(-1/sqrt(fan_in), 1/sqrt(fan_in)) for weight and bias (stored (in,out)).
       BatchNorm1d: gamma=1, beta=0, running_mean=0, running_var=1, eps=1e-5."""
    eps = 1e-5
    hidden = []
    dims = [init_size] + [hidden_size] * (num_hidden_layers + 1)
    for li in range(len(dims) - 1):
        fan_in, fan_out = dims[li], dims[li + 1]
        key, kw, kb = jax.random.split(key, 3)
        bound = 1.0 / jnp.sqrt(fan_in)
        w = jax.random.uniform(kw, (fan_in, fan_out), jnp.float32, -bound, bound)
        b = jax.random.uniform(kb, (fan_out,), jnp.float32, -bound, bound)
        gamma = jnp.ones((fan_out,), jnp.float32)
        beta = jnp.zeros((fan_out,), jnp.float32)
        rmean = jnp.zeros((fan_out,), jnp.float32)
        rvar = jnp.ones((fan_out,), jnp.float32)
        hidden.append((w, b, gamma, beta, rmean, rvar))

    key, kw, kb = jax.random.split(key, 3)
    bound = 1.0 / jnp.sqrt(hidden_size)
    wf = jax.random.uniform(kw, (hidden_size, 1), jnp.float32, -bound, bound)
    bf = jax.random.uniform(kb, (1,), jnp.float32, -bound, bound)
    return {"hidden": hidden, "final": (wf, bf), "eps": eps}


def fold_and_pad_params(params, lane_pad):
    """Fold BN into the linear weights, pad to lane width P, stack hidden->hidden
       layers into one bf16 slab; keep layer 0 separate (VPU path) in f32."""
    eps = params["eps"]
    hidden = params["hidden"]
    P = lane_pad

    def fold(w, b, gamma, beta, rmean, rvar):
        scale = gamma / jnp.sqrt(rvar + eps)
        shift = beta - rmean * scale
        return w * scale[None, :], b * scale + shift

    # layer 0: (init_size -> hidden), unpadded K, padded output lanes, f32
    w, b, gamma, beta, rmean, rvar = hidden[0]
    w_f, b_f = fold(w, b, gamma, beta, rmean, rvar)
    F, H = w.shape
    w0 = jnp.zeros((F, P), jnp.float32).at[:, :H].set(w_f)
    b0 = jnp.zeros((1, P), jnp.float32).at[0, :H].set(b_f)

    # hidden -> hidden layers: stacked, bf16 for the MXU
    L = len(hidden) - 1
    w_stack = jnp.zeros((L, P, P), jnp.float32)
    b_stack = jnp.zeros((L, 1, P), jnp.float32)
    for l in range(L):
        w, b, gamma, beta, rmean, rvar = hidden[l + 1]
        w_f, b_f = fold(w, b, gamma, beta, rmean, rvar)
        fi, fo = w.shape
        w_stack = w_stack.at[l, :fi, :fo].set(w_f)
        b_stack = b_stack.at[l, 0, :fo].set(b_f)
    w_stack = w_stack.astype(jnp.bfloat16)

    wf, bf = params["final"]
    Hf = wf.shape[0]
    wf_p = jnp.zeros((1, P), jnp.float32).at[0, :Hf].set(wf[:, 0])
    bf_p = bf.reshape(1, 1).astype(jnp.float32)
    return w0, b0, w_stack, b_stack, wf_p, bf_p


# ------------------------- pure-JAX reference -------------------------------- #

def simple_forward_ref(x, params):
    eps = params["eps"]
    h = x
    for (w, b, gamma, beta, rmean, rvar) in params["hidden"]:
        scale = gamma / jnp.sqrt(rvar + eps)
        shift = beta - rmean * scale
        h = jnp.maximum((h @ w + b) * scale + shift, 0.0)
    wf, bf = params["final"]
    return (jnp.tanh(h @ wf + bf) + 1.0) * 0.5


# ---------------------------------- main ------------------------------------- #

if __name__ == "__main__":
    # small shapes consistent with the module
    batch = 8
    init_size = 2
    hidden_size = 32
    num_hidden_layers = 3

    key = jax.random.PRNGKey(0)
    key, kx, kp = jax.random.split(key, 3)
    x = jax.random.normal(kx, (batch, init_size), jnp.float32)

    params = make_params(kp, init_size, hidden_size, num_hidden_layers)

    P = _round_up(hidden_size, 128)          # lane-dense hidden width (32 -> 128)
    kparams = fold_and_pad_params(params, P)

    out = fused_simple_forward(x, kparams)
    out = jax.block_until_ready(out)

    ref = simple_forward_ref(x, params)
    assert out.shape == (batch, 1), out.shape
    assert bool(jnp.all((out >= 0.0) & (out <= 1.0)))
    # bf16 MXU operands -> loosened tolerance vs. the f32 reference
    assert jnp.allclose(out, ref, atol=2e-2, rtol=2e-2), jnp.max(jnp.abs(out - ref))

    print("KERNEL_OK")
</pallas_src>

<mosaic_0001>
module attributes {stable_mosaic.version = 11 : i64} {
  func.func @kernel(%arg0: i32, %arg1: memref<8x2xf32, #tpu.memory_space<vmem>>, %arg2: memref<2x128xf32, #tpu.memory_space<vmem>>, %arg3: memref<1x128xf32, #tpu.memory_space<vmem>>, %arg4: memref<3x128x128xbf16, #tpu.memory_space<vmem>>, %arg5: memref<3x1x128xf32, #tpu.memory_space<vmem>>, %arg6: memref<1x128xf32, #tpu.memory_space<vmem>>, %arg7: memref<1x1xf32, #tpu.memory_space<vmem>>, %arg8: memref<1x8xf32, #tpu.memory_space<vmem>>) attributes {dimension_semantics = [#tpu.dimension_semantics<parallel>], iteration_bounds = array<i64: 1>, scalar_prefetch = 0 : i64, scratch_operands = 0 : i64, tpu.core_type = #tpu.core_type<tc>, window_params = [{transform_indices = @transform_0, window_bounds = array<i64: 8, 2>}, {pipeline_mode = #tpu.pipeline_mode<synchronous>, transform_indices = @transform_1, window_bounds = array<i64: 2, 128>}, {pipeline_mode = #tpu.pipeline_mode<synchronous>, transform_indices = @transform_2, window_bounds = array<i64: 1, 128>}, {pipeline_mode = #tpu.pipeline_mode<synchronous>, transform_indices = @transform_3, window_bounds = array<i64: 3, 128, 128>}, {pipeline_mode = #tpu.pipeline_mode<synchronous>, transform_indices = @transform_4, window_bounds = array<i64: 3, 1, 128>}, {pipeline_mode = #tpu.pipeline_mode<synchronous>, transform_indices = @transform_5, window_bounds = array<i64: 1, 128>}, {pipeline_mode = #tpu.pipeline_mode<synchronous>, transform_indices = @transform_6, window_bounds = array<i64: 1, 1>}, {transform_indices = @transform_7, window_bounds = array<i64: 1, 8>}]} {
    %c0 = arith.constant 0 : index
    %c0_0 = arith.constant 0 : index
    %0 = vector.load %arg3[%c0, %c0_0] : memref<1x128xf32, #tpu.memory_space<vmem>>, vector<1x128xf32>
    %c0_1 = arith.constant 0 : index
    %c0_2 = arith.constant 0 : index
    %1 = vector.load %arg1[%c0_1, %c0_2] : memref<8x2xf32, #tpu.memory_space<vmem>>, vector<8x1xf32>
    %c0_3 = arith.constant 0 : index
    %c0_4 = arith.constant 0 : index
    %2 = vector.load %arg2[%c0_3, %c0_4] : memref<2x128xf32, #tpu.memory_space<vmem>>, vector<1x128xf32>
    %3 = vector.broadcast %1 : vector<8x1xf32> to vector<8x128xf32>
    %4 = vector.broadcast %2 : vector<1x128xf32> to vector<8x128xf32>
    %5 = arith.mulf %3, %4 : vector<8x128xf32>
    %6 = vector.broadcast %0 : vector<1x128xf32> to vector<8x128xf32>
    %7 = arith.addf %6, %5 : vector<8x128xf32>
    %c0_5 = arith.constant 0 : index
    %c1 = arith.constant 1 : index
    %8 = vector.load %arg1[%c0_5, %c1] : memref<8x2xf32, #tpu.memory_space<vmem>>, vector<8x1xf32>
    %c1_6 = arith.constant 1 : index
    %c0_7 = arith.constant 0 : index
    %9 = vector.load %arg2[%c1_6, %c0_7] : memref<2x128xf32, #tpu.memory_space<vmem>>, vector<1x128xf32>
    %10 = vector.broadcast %8 : vector<8x1xf32> to vector<8x128xf32>
    %11 = vector.broadcast %9 : vector<1x128xf32> to vector<8x128xf32>
    %12 = arith.mulf %10, %11 : vector<8x128xf32>
    %13 = arith.addf %7, %12 : vector<8x128xf32>
    %cst = arith.constant 0.000000e+00 : f32
    %14 = vector.broadcast %cst : f32 to vector<8x128xf32>
    %15 = arith.maximumf %13, %14 : vector<8x128xf32>
    %16 = arith.truncf %15 : vector<8x128xf32> to vector<8x128xbf16>
    %c0_8 = arith.constant 0 : index
    %c0_9 = arith.constant 0 : index
    %c0_10 = arith.constant 0 : index
    %17 = vector.load %arg4[%c0_8, %c0_9, %c0_10] : memref<3x128x128xbf16, #tpu.memory_space<vmem>>, vector<1x128x128xbf16>
    %18 = vector.shape_cast %17 : vector<1x128x128xbf16> to vector<128x128xbf16>
    %cst_11 = arith.constant dense<0.000000e+00> : vector<8x128xf32>
    %19 = tpu.matmul %16, %18, %cst_11 {dimension_numbers = #tpu.dot_dimension_numbers<[1], [0], [0], [1], [0, 0, 1, 1], [], []>} : vector<8x128xbf16>, vector<128x128xbf16>, vector<8x128xf32> -> vector<8x128xf32>
    %c0_12 = arith.constant 0 : index
    %c0_13 = arith.constant 0 : index
    %c0_14 = arith.constant 0 : index
    %20 = vector.load %arg5[%c0_12, %c0_13, %c0_14] : memref<3x1x128xf32, #tpu.memory_space<vmem>>, vector<1x1x128xf32>
    %21 = vector.shape_cast %20 : vector<1x1x128xf32> to vector<1x128xf32>
    %22 = vector.broadcast %21 : vector<1x128xf32> to vector<8x128xf32>
    %23 = arith.addf %19, %22 : vector<8x128xf32>
    %cst_15 = arith.constant 0.000000e+00 : f32
    %24 = vector.broadcast %cst_15 : f32 to vector<8x128xf32>
    %25 = arith.maximumf %23, %24 : vector<8x128xf32>
    %26 = arith.truncf %25 : vector<8x128xf32> to vector<8x128xbf16>
    %c1_16 = arith.constant 1 : index
    %c0_17 = arith.constant 0 : index
    %c0_18 = arith.constant 0 : index
    %27 = vector.load %arg4[%c1_16, %c0_17, %c0_18] : memref<3x128x128xbf16, #tpu.memory_space<vmem>>, vector<1x128x128xbf16>
    %28 = vector.shape_cast %27 : vector<1x128x128xbf16> to vector<128x128xbf16>
    %cst_19 = arith.constant dense<0.000000e+00> : vector<8x128xf32>
    %29 = tpu.matmul %26, %28, %cst_19 {dimension_numbers = #tpu.dot_dimension_numbers<[1], [0], [0], [1], [0, 0, 1, 1], [], []>} : vector<8x128xbf16>, vector<128x128xbf16>, vector<8x128xf32> -> vector<8x128xf32>
    %c1_20 = arith.constant 1 : index
    %c0_21 = arith.constant 0 : index
    %c0_22 = arith.constant 0 : index
    %30 = vector.load %arg5[%c1_20, %c0_21, %c0_22] : memref<3x1x128xf32, #tpu.memory_space<vmem>>, vector<1x1x128xf32>
    %31 = vector.shape_cast %30 : vector<1x1x128xf32> to vector<1x128xf32>
    %32 = vector.broadcast %31 : vector<1x128xf32> to vector<8x128xf32>
    %33 = arith.addf %29, %32 : vector<8x128xf32>
    %cst_23 = arith.constant 0.000000e+00 : f32
    %34 = vector.broadcast %cst_23 : f32 to vector<8x128xf32>
    %35 = arith.maximumf %33, %34 : vector<8x128xf32>
    %36 = arith.truncf %35 : vector<8x128xf32> to vector<8x128xbf16>
    %c2 = arith.constant 2 : index
    %c0_24 = arith.constant 0 : index
    %c0_25 = arith.constant 0 : index
    %37 = vector.load %arg4[%c2, %c0_24, %c0_25] : memref<3x128x128xbf16, #tpu.memory_space<vmem>>, vector<1x128x128xbf16>
    %38 = vector.shape_cast %37 : vector<1x128x128xbf16> to vector<128x128xbf16>
    %cst_26 = arith.constant dense<0.000000e+00> : vector<8x128xf32>
    %39 = tpu.matmul %36, %38, %cst_26 {dimension_numbers = #tpu.dot_dimension_numbers<[1], [0], [0], [1], [0, 0, 1, 1], [], []>} : vector<8x128xbf16>, vector<128x128xbf16>, vector<8x128xf32> -> vector<8x128xf32>
    %c2_27 = arith.constant 2 : index
    %c0_28 = arith.constant 0 : index
    %c0_29 = arith.constant 0 : index
    %40 = vector.load %arg5[%c2_27, %c0_28, %c0_29] : memref<3x1x128xf32, #tpu.memory_space<vmem>>, vector<1x1x128xf32>
    %41 = vector.shape_cast %40 : vector<1x1x128xf32> to vector<1x128xf32>
    %42 = vector.broadcast %41 : vector<1x128xf32> to vector<8x128xf32>
    %43 = arith.addf %39, %42 : vector<8x128xf32>
    %cst_30 = arith.constant 0.000000e+00 : f32
    %44 = vector.broadcast %cst_30 : f32 to vector<8x128xf32>
    %45 = arith.maximumf %43, %44 : vector<8x128xf32>
    %c0_31 = arith.constant 0 : index
    %c0_32 = arith.constant 0 : index
    %46 = vector.load %arg6[%c0_31, %c0_32] : memref<1x128xf32, #tpu.memory_space<vmem>>, vector<1x128xf32>
    %47 = vector.broadcast %46 : vector<1x128xf32> to vector<8x128xf32>
    %48 = arith.mulf %45, %47 : vector<8x128xf32>
    %cst_33 = arith.constant dense<0.000000e+00> : vector<8xf32>
    %49 = vector.multi_reduction <add>, %48, %cst_33 [1] : vector<8x128xf32> to vector<8xf32>
    %50 = vector.shape_cast %49 : vector<8xf32> to vector<8x1xf32>
    %c0_34 = arith.constant 0 : index
    %c0_35 = arith.constant 0 : index
    %51 = vector.load %arg7[%c0_34, %c0_35] : memref<1x1xf32, #tpu.memory_space<vmem>>, vector<1x1xf32>
    %52 = vector.broadcast %51 : vector<1x1xf32> to vector<8x1xf32>
    %53 = arith.addf %50, %52 : vector<8x1xf32>
    %54 = math.tanh %53 : vector<8x1xf32>
    %cst_36 = arith.constant 1.000000e+00 : f32
    %55 = vector.broadcast %cst_36 : f32 to vector<8x1xf32>
    %56 = arith.addf %54, %55 : vector<8x1xf32>
    %cst_37 = arith.constant 5.000000e-01 : f32
    %57 = vector.broadcast %cst_37 : f32 to vector<8x1xf32>
    %58 = arith.mulf %56, %57 : vector<8x1xf32>
    %59 = tpu.transpose %58, [1, 0] : vector<8x1xf32> -> vector<1x8xf32>
    %c0_38 = arith.constant 0 : index
    %c0_39 = arith.constant 0 : index
    %60 = vector.load %arg8[%c0_38, %c0_39] : memref<1x8xf32, #tpu.memory_space<vmem>>, vector<1x8xf32>
    tpu.vector_store %arg8[%c0_38, %c0_39], %59 {strides = array<i32>} : memref<1x8xf32, #tpu.memory_space<vmem>>, vector<1x8xf32>,
    return
  }
  func.func @transform_0(%arg0: i32) -> (i32, i32) {
    %c0_i32 = arith.constant 0 : i32
    %c0_i32_0 = arith.constant 0 : i32
    return %arg0, %c0_i32 : i32, i32
  }
  func.func @transform_1(%arg0: i32) -> (i32, i32) {
    %c0_i32 = arith.constant 0 : i32
    %c0_i32_0 = arith.constant 0 : i32
    %c0_i32_1 = arith.constant 0 : i32
    return %c0_i32, %c0_i32_0 : i32, i32
  }
  func.func @transform_2(%arg0: i32) -> (i32, i32) {
    %c0_i32 = arith.constant 0 : i32
    %c0_i32_0 = arith.constant 0 : i32
    %c0_i32_1 = arith.constant 0 : i32
    return %c0_i32, %c0_i32_0 : i32, i32
  }
  func.func @transform_3(%arg0: i32) -> (i32, i32, i32) {
    %c0_i32 = arith.constant 0 : i32
    %c0_i32_0 = arith.constant 0 : i32
    %c0_i32_1 = arith.constant 0 : i32
    %c0_i32_2 = arith.constant 0 : i32
    return %c0_i32, %c0_i32_0, %c0_i32_1 : i32, i32, i32
  }
  func.func @transform_4(%arg0: i32) -> (i32, i32, i32) {
    %c0_i32 = arith.constant 0 : i32
    %c0_i32_0 = arith.constant 0 : i32
    %c0_i32_1 = arith.constant 0 : i32
    %c0_i32_2 = arith.constant 0 : i32
    return %c0_i32, %c0_i32_0, %c0_i32_1 : i32, i32, i32
  }
  func.func @transform_5(%arg0: i32) -> (i32, i32) {
    %c0_i32 = arith.constant 0 : i32
    %c0_i32_0 = arith.constant 0 : i32
    %c0_i32_1 = arith.constant 0 : i32
    return %c0_i32, %c0_i32_0 : i32, i32
  }
  func.func @transform_6(%arg0: i32) -> (i32, i32) {
    %c0_i32 = arith.constant 0 : i32
    %c0_i32_0 = arith.constant 0 : i32
    %c0_i32_1 = arith.constant 0 : i32
    return %c0_i32, %c0_i32_0 : i32, i32
  }
  func.func @transform_7(%arg0: i32) -> (i32, i32) {
    %c0_i32 = arith.constant 0 : i32
    %c0_i32_0 = arith.constant 0 : i32
    return %c0_i32, %arg0 : i32, i32
  }
}

</mosaic_0001>

<llo_original>
// kernel: tpu_custom_call.1
$region0: #{tpu_custom_call.1}
  #allocation0 [shape = 'u32[]', space=smem, size = 0x4, offset = 0x4, fixed_abs, tag = 'smem constant byte address 0x4 - core index']
  #allocation1 [shape = 'u32[72,128]{1,0:T(1,128)}', space=vmem, size = 0x9000, scoped, tag = 'internal scratch']
  #allocation2 [shape = 'f32[1,1]{1,0:T(1,128)S(1)}', space=vmem, size = 0x200, scoped, tag = 'scoped memory for tpu_custom_call.1']
  %s0 = inlined_call_operand.vmem [shape: f32[8,2], index: 0, kind: input, shape index: {}]
  %s1 = inlined_call_operand.vmem [shape: f32[2,128], index: 1, kind: input, shape index: {}]
  %s2 = inlined_call_operand.vmem [shape: f32[1,128], index: 2, kind: input, shape index: {}]
  %s3 = inlined_call_operand.hbm [shape: bf16[3,128,128], index: 3, kind: input, shape index: {}]
  %s4 = inlined_call_operand.vmem [shape: f32[3,1,128], index: 4, kind: input, shape index: {}]
  %s5 = inlined_call_operand.vmem [shape: f32[1,128], index: 5, kind: input, shape index: {}]
  %s6 = inlined_call_operand.<no memory space> [shape: f32[1,1], index: 6, kind: input, shape index: {}]
  %s7 = inlined_call_operand.hbm [shape: f32[1,8], index: 7, kind: output, shape index: {}]
  %s8 = sld [smem:[#allocation0]]
  $region42: #{tpu_custom_call.1} parent=0
    _
  %s10 = ssub.s32 1, %s8
  %s11 = scalar_select 0, %s10, %s8
  %v12 = vstv %s6
  %13 = vst [vmem:[#allocation2] sm:$0x1] %v12
  $region1: #{tpu_custom_call.1} parent=0
    #allocation3 [shape = 'u8[98304]{0}', space=vmem, size = 0x18000, scoped, tag = 'input window, operand 3, single buffered']
    #allocation4 [shape = 's32[1]{0}', space=sflag, size = 0x4, scoped, tag = 'scoped memory for tpu_custom_call.1']
    #allocation5 [shape = 's32[1]{0}', space=sflag, size = 0x4, scoped, tag = 'scoped memory for tpu_custom_call.1']
    #allocation6 [shape = 'u8[512]{0}', space=vmem, size = 0x400, scoped, tag = 'output window, operand 0, single buffered']
    %14 = vsyncpa [#allocation4], 0
    %15 = vsyncpa [#allocation5], 0
    // Predicated region
    $region2: #{tpu_custom_call.1} parent=1 // pred_check
      _
    $region3: #{tpu_custom_call.1} parent=1 // pred_check_branch
      %17 = sbr.rel (0) target = $region5
    $region4: #{tpu_custom_call.1} parent=1 // pred_region
      _
    $region5: #{tpu_custom_call.1} parent=1 // pred_fallthru
      _
    // Predicated region
    $region6: #{tpu_custom_call.1} parent=1 // pred_check
      _
    $region7: #{tpu_custom_call.1} parent=1 // pred_check_branch
      %19 = sbr.rel (0) target = $region9
    $region8: #{tpu_custom_call.1} parent=1 // pred_region
      _
    $region9: #{tpu_custom_call.1} parent=1 // pred_fallthru
      _
    // Predicated region
    $region10: #{tpu_custom_call.1} parent=1 // pred_check
      _
    $region11: #{tpu_custom_call.1} parent=1 // pred_check_branch
      %21 = sbr.rel (0) target = $region13
    $region12: #{tpu_custom_call.1} parent=1 // pred_region
      _
    $region13: #{tpu_custom_call.1} parent=1 // pred_fallthru
      _
    // Predicated region
    $region14: #{tpu_custom_call.1} parent=1 // pred_check
      _
    $region15: #{tpu_custom_call.1} parent=1 // pred_check_branch
      %23 = sbr.rel (0) target = $region17
    $region16: #{tpu_custom_call.1} parent=1 // pred_region
      %25 = vsyncadd [#allocation4], 0
      %s26 = sshll.u32 %s3, 4
      %s27 = int_to_ptr.hbm [resolvable:$true] %s26
      %s28 = sshll.u32 [#allocation3], 4
      %s29 = int_to_ptr.vmem [resolvable:$true] %s28
      %34 = dma.hbm_to_vmem [thread:$0]  %s27, 3072, %s29, [#allocation4], 64, 64, 4
    $region17: #{tpu_custom_call.1} parent=1 // pred_fallthru
      _
    // Predicated region
    $region18: #{tpu_custom_call.1} parent=1 // pred_check
      _
    $region19: #{tpu_custom_call.1} parent=1 // pred_check_branch
      %36 = sbr.rel (0) target = $region21
    $region20: #{tpu_custom_call.1} parent=1 // pred_region
      _
    $region21: #{tpu_custom_call.1} parent=1 // pred_fallthru
      _
    // Predicated region
    $region22: #{tpu_custom_call.1} parent=1 // pred_check
      _
    $region23: #{tpu_custom_call.1} parent=1 // pred_check_branch
      %38 = sbr.rel (0) target = $region25
    $region24: #{tpu_custom_call.1} parent=1 // pred_region
      _
    $region25: #{tpu_custom_call.1} parent=1 // pred_fallthru
      _
    // Predicated region
    $region26: #{tpu_custom_call.1} parent=1 // pred_check
      _
    $region27: #{tpu_custom_call.1} parent=1 // pred_check_branch
      %40 = sbr.rel (0) target = $region29
    $region28: #{tpu_custom_call.1} parent=1 // pred_region
      _
    $region29: #{tpu_custom_call.1} parent=1 // pred_fallthru
      _
    // Predicated region
    $region30: #{tpu_custom_call.1} parent=1 // pred_check
      _
    $region31: #{tpu_custom_call.1} parent=1 // pred_check_branch
      %42 = sbr.rel (0) target = $region33
    $region32: #{tpu_custom_call.1} parent=1 // pred_region
      %44 = dma.done [#allocation4], 3072
    $region33: #{tpu_custom_call.1} parent=1 // pred_fallthru
      _
    %v45 = vld [vmem:[%s2] sm:$0x1]
    %v46 = vld [vmem:[%s0] sm:$0xff]
    %v47 = vld [vmem:[%s1] sm:$0x1]
    %49 = vset.pattern.permute.xlu0 0
    %50 = vperm.xlu0 %49, %v46
    %v51 = vpop.permute.xlu0 %50
    %v53 = vperm.slane %v47, 0
    %v54 = vmul.f32 %v51, %v53
    %v56 = vperm.slane %v45, 0
    %v58 = vadd.f32 %v56, %v54
    %v59 = vld [vmem:[%s1 + $0x1] sm:$0x1]
    %60 = vset.pattern.permute.xlu0 1
    %61 = vperm.xlu0 %60, %v46
    %v62 = vpop.permute.xlu0 %61
    %v64 = vperm.slane %v59, 0
    %v65 = vmul.f32 %v62, %v64
    %v66 = vadd.f32 %v58, %v65
    %v67 = vmax.f32 %v66, 0.0
    %v68 = vpack.c.bf16 %v67, %v67
    %v69 = vld [vmem:[#allocation3] sm:$0xf]
    %v70 = vld [vmem:[#allocation3 + $0x4] sm:$0xf]
    %v71 = vld [vmem:[#allocation3 + $0x8] sm:$0xf]
    %v72 = vld [vmem:[#allocation3 + $0xc] sm:$0xf]
    %v73 = vld [vmem:[#allocation3 + $0x10] sm:$0xf]
    %v74 = vld [vmem:[#allocation3 + $0x14] sm:$0xf]
    %v75 = vld [vmem:[#allocation3 + $0x18] sm:$0xf]
    %v76 = vld [vmem:[#allocation3 + $0x1c] sm:$0xf]
    %v77 = vld [vmem:[#allocation3 + $0x20] sm:$0xf]
    %v78 = vld [vmem:[#allocation3 + $0x24] sm:$0xf]
    %v79 = vld [vmem:[#allocation3 + $0x28] sm:$0xf]
    %v80 = vld [vmem:[#allocation3 + $0x2c] sm:$0xf]
    %v81 = vld [vmem:[#allocation3 + $0x30] sm:$0xf]
    %v82 = vld [vmem:[#allocation3 + $0x34] sm:$0xf]
    %v83 = vld [vmem:[#allocation3 + $0x38] sm:$0xf]
    %v84 = vld [vmem:[#allocation3 + $0x3c] sm:$0xf]
    %v85 = vld [vmem:[%s4] sm:$0x1]
    %v87 = vperm.slane %v85, 0
    %v105 = vunpack.c.l.b16 %v69
    %v106 = vunpack.c.l.b16 %v70
    %v107 = vunpack.c.l.b16 %v71
    %v108 = vunpack.c.l.b16 %v72
    %v109 = vunpack.c.l.b16 %v73
    %v110 = vunpack.c.l.b16 %v74
    %v111 = vunpack.c.l.b16 %v75
    %v112 = vunpack.c.l.b16 %v76
    %v113 = vunpack.c.l.b16 %v77
    %v114 = vunpack.c.l.b16 %v78
    %v115 = vunpack.c.l.b16 %v79
    %v116 = vunpack.c.l.b16 %v80
    %v117 = vunpack.c.l.b16 %v81
    %v118 = vunpack.c.l.b16 %v82
    %v119 = vunpack.c.l.b16 %v83
    %v120 = vunpack.c.l.b16 %v84
    %v121 = vpack.c.b16 %v106, %v105
    %v122 = vpack.c.b16 %v108, %v107
    %v123 = vpack.c.b16 %v110, %v109
    %v124 = vpack.c.b16 %v112, %v111
    %v125 = vpack.c.b16 %v114, %v113
    %v126 = vpack.c.b16 %v116, %v115
    %v127 = vpack.c.b16 %v118, %v117
    %v128 = vpack.c.b16 %v120, %v119
    %137 = vmatpush.bf16.msra.mxu0 %v128
    %138 = vmatpush.bf16.msra.mxu0 %v127
    %139 = vmatpush.bf16.msra.mxu0 %v126
    %140 = vmatpush.bf16.msra.mxu0 %v125
    %141 = vmatpush.bf16.msra.mxu0 %v124
    %142 = vmatpush.bf16.msra.mxu0 %v123
    %143 = vmatpush.bf16.msra.mxu0 %v122
    %144 = vmatpush.bf16.msra.mxu0 %v121
    %145 = vmatmul.bf16.gmra.mxu0 %v68
    %v146 = vpop.f32.mrf.mxu0
    %v147 = vadd.f32 %v87, %v146
    %v148 = vpop.f32.mrf.mxu0
    %149 = vdwg.mxu0
    %v150 = vmax.f32 %v147, 0.0
    %v151 = vpack.c.bf16 %v150, %v150
    %s152 = scalar_lea.vmem [#allocation3], 64
    %v153 = vld [vmem:[%s152] sm:$0xf]
    %v154 = vld [vmem:[%s152 + $0x4] sm:$0xf]
    %v155 = vld [vmem:[%s152 + $0x8] sm:$0xf]
    %v156 = vld [vmem:[%s152 + $0xc] sm:$0xf]
    %v157 = vld [vmem:[%s152 + $0x10] sm:$0xf]
    %v158 = vld [vmem:[%s152 + $0x14] sm:$0xf]
    %v159 = vld [vmem:[%s152 + $0x18] sm:$0xf]
    %v160 = vld [vmem:[%s152 + $0x1c] sm:$0xf]
    %v161 = vld [vmem:[%s152 + $0x20] sm:$0xf]
    %v162 = vld [vmem:[%s152 + $0x24] sm:$0xf]
    %v163 = vld [vmem:[%s152 + $0x28] sm:$0xf]
    %v164 = vld [vmem:[%s152 + $0x2c] sm:$0xf]
    %v165 = vld [vmem:[%s152 + $0x30] sm:$0xf]
    %v166 = vld [vmem:[%s152 + $0x34] sm:$0xf]
    %v167 = vld [vmem:[%s152 + $0x38] sm:$0xf]
    %v168 = vld [vmem:[%s152 + $0x3c] sm:$0xf]
    %s169 = scalar_lea.vmem %s4, 1
    %v170 = vld [vmem:[%s169] sm:$0x1]
    %v172 = vperm.slane %v170, 0
    %v190 = vunpack.c.l.b16 %v153
    %v191 = vunpack.c.l.b16 %v154
    %v192 = vunpack.c.l.b16 %v155
    %v193 = vunpack.c.l.b16 %v156
    %v194 = vunpack.c.l.b16 %v157
    %v195 = vunpack.c.l.b16 %v158
    %v196 = vunpack.c.l.b16 %v159
    %v197 = vunpack.c.l.b16 %v160
    %v198 = vunpack.c.l.b16 %v161
    %v199 = vunpack.c.l.b16 %v162
    %v200 = vunpack.c.l.b16 %v163
    %v201 = vunpack.c.l.b16 %v164
    %v202 = vunpack.c.l.b16 %v165
    %v203 = vunpack.c.l.b16 %v166
    %v204 = vunpack.c.l.b16 %v167
    %v205 = vunpack.c.l.b16 %v168
    %v206 = vpack.c.b16 %v191, %v190
    %v207 = vpack.c.b16 %v193, %v192
    %v208 = vpack.c.b16 %v195, %v194
    %v209 = vpack.c.b16 %v197, %v196
    %v210 = vpack.c.b16 %v199, %v198
    %v211 = vpack.c.b16 %v201, %v200
    %v212 = vpack.c.b16 %v203, %v202
    %v213 = vpack.c.b16 %v205, %v204
    %222 = vmatpush.bf16.msra.mxu0 %v213
    %223 = vmatpush.bf16.msra.mxu0 %v212
    %224 = vmatpush.bf16.msra.mxu0 %v211
    %225 = vmatpush.bf16.msra.mxu0 %v210
    %226 = vmatpush.bf16.msra.mxu0 %v209
    %227 = vmatpush.bf16.msra.mxu0 %v208
    %228 = vmatpush.bf16.msra.mxu0 %v207
    %229 = vmatpush.bf16.msra.mxu0 %v206
    %230 = vmatmul.bf16.gmra.mxu0 %v151
    %v231 = vpop.f32.mrf.mxu0
    %v232 = vadd.f32 %v172, %v231
    %v233 = vpop.f32.mrf.mxu0
    %234 = vdwg.mxu0
    %v235 = vmax.f32 %v232, 0.0
    %v236 = vpack.c.bf16 %v235, %v235
    %s237 = scalar_lea.vmem [#allocation3], 128
    %v238 = vld [vmem:[%s237] sm:$0xf]
    %v239 = vld [vmem:[%s237 + $0x4] sm:$0xf]
    %v240 = vld [vmem:[%s237 + $0x8] sm:$0xf]
    %v241 = vld [vmem:[%s237 + $0xc] sm:$0xf]
    %v242 = vld [vmem:[%s237 + $0x10] sm:$0xf]
    %v243 = vld [vmem:[%s237 + $0x14] sm:$0xf]
    %v244 = vld [vmem:[%s237 + $0x18] sm:$0xf]
    %v245 = vld [vmem:[%s237 + $0x1c] sm:$0xf]
    %v246 = vld [vmem:[%s237 + $0x20] sm:$0xf]
    %v247 = vld [vmem:[%s237 + $0x24] sm:$0xf]
    %v248 = vld [vmem:[%s237 + $0x28] sm:$0xf]
    %v249 = vld [vmem:[%s237 + $0x2c] sm:$0xf]
    %v250 = vld [vmem:[%s237 + $0x30] sm:$0xf]
    %v251 = vld [vmem:[%s237 + $0x34] sm:$0xf]
    %v252 = vld [vmem:[%s237 + $0x38] sm:$0xf]
    %v253 = vld [vmem:[%s237 + $0x3c] sm:$0xf]
    %s254 = scalar_lea.vmem %s4, 2
    %v255 = vld [vmem:[%s254] sm:$0x1]
    %v257 = vperm.slane %v255, 0
    %v275 = vunpack.c.l.b16 %v238
    %v276 = vunpack.c.l.b16 %v239
    %v277 = vunpack.c.l.b16 %v240
    %v278 = vunpack.c.l.b16 %v241
    %v279 = vunpack.c.l.b16 %v242
    %v280 = vunpack.c.l.b16 %v243
    %v281 = vunpack.c.l.b16 %v244
    %v282 = vunpack.c.l.b16 %v245
    %v283 = vunpack.c.l.b16 %v246
    %v284 = vunpack.c.l.b16 %v247
    %v285 = vunpack.c.l.b16 %v248
    %v286 = vunpack.c.l.b16 %v249
    %v287 = vunpack.c.l.b16 %v250
    %v288 = vunpack.c.l.b16 %v251
    %v289 = vunpack.c.l.b16 %v252
    %v290 = vunpack.c.l.b16 %v253
    %v291 = vpack.c.b16 %v276, %v275
    %v292 = vpack.c.b16 %v278, %v277
    %v293 = vpack.c.b16 %v280, %v279
    %v294 = vpack.c.b16 %v282, %v281
    %v295 = vpack.c.b16 %v284, %v283
    %v296 = vpack.c.b16 %v286, %v285
    %v297 = vpack.c.b16 %v288, %v287
    %v298 = vpack.c.b16 %v290, %v289
    %307 = vmatpush.bf16.msra.mxu0 %v298
    %308 = vmatpush.bf16.msra.mxu0 %v297
    %309 = vmatpush.bf16.msra.mxu0 %v296
    %310 = vmatpush.bf16.msra.mxu0 %v295
    %311 = vmatpush.bf16.msra.mxu0 %v294
    %312 = vmatpush.bf16.msra.mxu0 %v293
    %313 = vmatpush.bf16.msra.mxu0 %v292
    %314 = vmatpush.bf16.msra.mxu0 %v291
    %315 = vmatmul.bf16.gmra.mxu0 %v236
    %v316 = vpop.f32.mrf.mxu0
    %v317 = vadd.f32 %v257, %v316
    %v318 = vpop.f32.mrf.mxu0
    %319 = vdwg.mxu0
    %v320 = vmax.f32 %v317, 0.0
    %v321 = vld [vmem:[%s5] sm:$0x1]
    %v323 = vperm.slane %v321, 0
    %v325 = vmul.f32 %v320, %v323
    %326 = vadd.xlane.f32.xlu0 %v325
    %v327 = vpop.xlane.xlu0 %326
    %v328 = vld [vmem:[#allocation2] sm:$0x1]
    %v330 = vperm.slane %v328, 0
    %v332 = vadd.f32 %v327, %v330
    %v333 = vtanh.pop %v332
    %v334 = vadd.f32 %v333, 1.0
    %v335 = vmul.f32 %v334, 0.5
    %336 = vxpose.xlu0.b32.start [1/16] %v335, 128
    %337 = vxpose.xlu0.b32.cont [2/16] 0.0, 128
    %338 = vxpose.xlu0.b32.cont [3/16] 0.0, 128
    %339 = vxpose.xlu0.b32.cont [4/16] 0.0, 128
    %340 = vxpose.xlu0.b32.cont [5/16] 0.0, 128
    %341 = vxpose.xlu0.b32.cont [6/16] 0.0, 128
    %342 = vxpose.xlu0.b32.cont [7/16] 0.0, 128
    %343 = vxpose.xlu0.b32.cont [8/16] 0.0, 128
    %344 = vxpose.xlu0.b32.cont [9/16] 0.0, 128
    %345 = vxpose.xlu0.b32.cont [10/16] 0.0, 128
    %346 = vxpose.xlu0.b32.cont [11/16] 0.0, 128
    %347 = vxpose.xlu0.b32.cont [12/16] 0.0, 128
    %348 = vxpose.xlu0.b32.cont [13/16] 0.0, 128
    %349 = vxpose.xlu0.b32.cont [14/16] 0.0, 128
    %350 = vxpose.xlu0.b32.cont [15/16] 0.0, 128
    %351 = vxpose.xlu0.b32.end [16/16] 0.0, 128
    %v352 = vpop.trf.xlu0
    %v353 = vpop.trf.xlu0
    %v354 = vpop.trf.xlu0
    %v355 = vpop.trf.xlu0
    %v356 = vpop.trf.xlu0
    %v357 = vpop.trf.xlu0
    %v358 = vpop.trf.xlu0
    %v359 = vpop.trf.xlu0
    %v360 = vpop.trf.xlu0
    %v361 = vpop.trf.xlu0
    %v362 = vpop.trf.xlu0
    %v363 = vpop.trf.xlu0
    %v364 = vpop.trf.xlu0
    %v365 = vpop.trf.xlu0
    %v366 = vpop.trf.xlu0
    %v367 = vpop.trf.xlu0
    %vm368 = vcmask 57344
    %369 = vst.msk [vmem:[#allocation6] sm:$0x1] %vm368, %v352
    // Predicated region
    $region34: #{tpu_custom_call.1} parent=1 // pred_check
      _
    $region35: #{tpu_custom_call.1} parent=1 // pred_check_branch
      %371 = sbr.rel (0) target = $region37
    $region36: #{tpu_custom_call.1} parent=1 // pred_region
      %373 = vsyncadd [#allocation5], 0
      %s375 = sshll.u32 [#allocation6], 4
      %s376 = int_to_ptr.vmem [resolvable:$true] %s375
      %s377 = sshll.u32 %s7, 4
      %s378 = int_to_ptr.hbm [resolvable:$true] %s377
      %380 = dma.vmem_to_hbm [thread:$0]  %s376, 16, %s378, [#allocation5]
    $region37: #{tpu_custom_call.1} parent=1 // pred_fallthru
      _
    // Predicated region
    $region38: #{tpu_custom_call.1} parent=1 // pred_check
      _
    $region39: #{tpu_custom_call.1} parent=1 // pred_check_branch
      %382 = sbr.rel (0) target = $region41
    $region40: #{tpu_custom_call.1} parent=1 // pred_region
      %384 = dma.done [#allocation5], 16
    $region41: #{tpu_custom_call.1} parent=1 // pred_fallthru
      _
    %385 = vsyncpa [#allocation4], 1
    %386 = vsyncpa [#allocation5], 1

</llo_original>
